<compile_context>
chip_gen: v7x
topology: tpu7x:2x2x1
jax: 0.10.0
libtpu: 0.0.40
codegen_flags: <defaults>
</compile_context>

<pallas_src>
import functools

import jax
import jax.numpy as jnp
from jax.experimental import pallas as pl
from jax.experimental.pallas import tpu as pltpu

_EPS = 1e-5
_K1_BLOCK_BYTES = 4 * 1024 * 1024     # kernel-1 x-tile byte budget (double-buffered by Pallas)
_K2_STEP_BYTES = 16 * 1024 * 1024     # kernel-2 per-grid-step working-set budget


def _vmem_limit_bytes(default=48 * 1024 * 1024):
    """Per-generation scoped-VMEM limit: ~0.75x physical VMEM, else 48 MiB."""
    try:
        info = pltpu.get_tpu_info()
        cap = getattr(info, "vmem_capacity_bytes", None)
        if cap:
            return int(cap) * 3 // 4
    except Exception:
        pass
    return default


def _pick_hw_tile(hw, c1, budget=_K1_BLOCK_BYTES):
    """HW tile for kernel 1: whole row if it fits the byte budget, else the
    largest multiple-of-128 divisor of hw whose block stays under budget."""
    if c1 * hw * 4 <= budget or hw % 128 != 0:
        # TODO(synk): HW that is not a multiple of 128 AND larger than the
        # budget would need Element/BoundedSlice tiling; full row is correct.
        return hw
    max_t = max(128, budget // (c1 * 4))
    best = None
    t = 128
    while t <= min(hw, max_t):
        if hw % t == 0:
            best = t
        t += 128
    return best if best is not None else hw


def _pick_channel_blocks(c2, c1, hw, budget=_K2_STEP_BYTES):
    """Even channel-block count for kernel 2 (fewest grid steps that fit the
    per-step budget).  Blocks must not cross the shuffle-half boundary
    (nblk even) and must be sublane aligned ((c2 // nblk) % 8 == 0).
    Returns None when no valid split exists (caller falls back to nblk=1)."""
    cands = [n for n in range(2, c2 // 8 + 1, 2)
             if c2 % n == 0 and (c2 // n) % 8 == 0]
    if not cands:
        return None
    for n in cands:                                    # ascending -> biggest blocks first
        per_step = 4 * hw * (2 * c1 + 5 * (c2 // n))   # x + out (dbl-buf) + live temps
        if per_step <= budget:
            return n
    return cands[-1]                                   # smallest blocks if nothing fits


# ----------------------------------------------------------------------------
# Kernel 1: input moments for BatchNorm batch statistics (two-phase BN, phase A).
# Grid (B, HW_tiles); B is "parallel" (per-batch partial outputs), HW tiles are
# the reduction axis ("arbitrary").  Per-step work is only C1 + C1^2 ops per
# pixel, so the kernel is purely HBM-streaming.
# ----------------------------------------------------------------------------
def bn_moments_kernel(x_ref, part_ref, sum_sc, gram_sc, *, c1):
    t = pl.program_id(1)

    @pl.when(t == 0)
    def _():
        sum_sc[...] = jnp.zeros_like(sum_sc)
        gram_sc[...] = jnp.zeros_like(gram_sc)

    x = x_ref[0]                                           # (C1, hw_t)
    sum_sc[...] += jnp.sum(x, axis=1, keepdims=True)

    if c1 <= 8:
        # Tiny C1: unrolled VPU/XLU path (a C1xC1 MXU matmul would be pure padding).
        for k in range(c1):
            gram_sc[:, k:k + 1] += jnp.sum(x * x[k:k + 1, :], axis=1,
                                           keepdims=True)
    else:
        # Larger C1: Gram on the MXU, contraction on the lane axis (A @ A^T form).
        gram_sc[...] += jax.lax.dot_general(
            x, x, dimension_numbers=(((1,), (1,)), ((), ())),
            preferred_element_type=jnp.float32)

    @pl.when(t == pl.num_programs(1) - 1)
    def _():
        part_ref[0, :, 0:1] = sum_sc[...]
        part_ref[0, :, 1:] = gram_sc[...]


# ----------------------------------------------------------------------------
# Kernel 2: fused 1x1 conv (MXU) + BN apply (folded scale/shift, one FMA)
# + LeakyReLU + ShuffleAttention (per-channel gates, one-pass variance), with
# channel_shuffle(groups=2) folded into the output placement.
# Grid (B, channel_blocks); both axes independent -> "parallel".
# ----------------------------------------------------------------------------
def fused_apply_kernel(x_ref, w_ref, rowp_ref, o_ref, *, hw, half, two_halves):
    x = x_ref[0]                                           # (C1, HW)
    # 1x1 conv on the MXU (padded K=C1 matmul co-issues; frees the VALU, which
    # is the binding slot for the rest of this kernel).
    y = jnp.dot(w_ref[...], x, preferred_element_type=jnp.float32)   # (cb, HW)

    # BatchNorm (batch stats) + affine, pre-folded into one FMA per element.
    scale = rowp_ref[:, 0:1]
    shift = rowp_ref[:, 1:2]
    y = y * scale + shift

    # LeakyReLU(0.2).
    z = jnp.where(y >= 0.0, y, 0.2 * y)

    # ShuffleAttention: both branches are per-(pre-shuffle-)channel lane-axis
    # reductions, unified into gate = sigmoid(alpha * z + bias):
    #   channel-attn rows: alpha = 0,             bias = cw * mean(z) + cb
    #   spatial-attn rows: alpha = sw*gw*rstd_gn, bias = sw*gb + sb - alpha*mean(z)
    isf = rowp_ref[:, 2:3]        # 1.0 for channel-attention rows, else 0.0
    cw = rowp_ref[:, 3:4]
    cbi = rowp_ref[:, 4:5]
    sg = rowp_ref[:, 5:6]         # sweight * gn_weight
    sc = rowp_ref[:, 6:7]         # sweight * gn_bias + sbias

    m = jnp.mean(z, axis=1, keepdims=True)                 # (cb, 1)
    e2 = jnp.mean(z * z, axis=1, keepdims=True)            # one-pass variance
    rs = jax.lax.rsqrt(e2 - m * m + _EPS)

    alpha = (1.0 - isf) * (sg * rs)
    bias = isf * (cw * m + cbi) + (1.0 - isf) * (sc - sg * rs * m)
    out = z * jax.nn.sigmoid(alpha * z + bias)             # (cb, HW)

    if two_halves:
        # Fallback (nblk == 1): channel_shuffle(groups=2) folded into placement,
        # pre-shuffle channel c = s*half + r -> row r, lanes [s*HW, (s+1)*HW).
        o_ref[0, :, 0:hw] = out[:half, :]
        o_ref[0, :, hw:2 * hw] = out[half:, :]
    else:
        # Split path: this channel block lies entirely inside one shuffle half;
        # the output BlockSpec already points at (row-block, lane-block) ->
        # one dense, lane-aligned store.
        o_ref[0, :, :] = out


def _row_param_table(scale, shift, params, C2, cg, c2g):
    """Per pre-shuffle channel: [scale, shift, is_ch, cw, cb, sw*gw, sw*gb+sb]."""
    cweight = params["sa_cweight"].reshape(c2g)
    cbias = params["sa_cbias"].reshape(c2g)
    sweight = params["sa_sweight"].reshape(c2g)
    sbias = params["sa_sbias"].reshape(c2g)
    gn_w = params["sa_gn_w"].reshape(c2g)
    gn_b = params["sa_gn_b"].reshape(c2g)

    j = jnp.arange(C2) % cg                 # position inside an attention group
    is_ch = j < c2g                         # first half -> channel attention
    cidx = jnp.where(is_ch, j, 0)
    sidx = jnp.where(is_ch, 0, j - c2g)
    cw_r = jnp.where(is_ch, cweight[cidx], 0.0)
    cb_r = jnp.where(is_ch, cbias[cidx], 0.0)
    sg_r = jnp.where(is_ch, 0.0, sweight[sidx] * gn_w[sidx])
    sc_r = jnp.where(is_ch, 0.0, sweight[sidx] * gn_b[sidx] + sbias[sidx])
    return jnp.stack(
        [scale, shift, is_ch.astype(jnp.float32), cw_r, cb_r, sg_r, sc_r],
        axis=1).astype(jnp.float32)                        # (C2, 7)


# ----------------------------------------------------------------------------
# Full module forward.
# ----------------------------------------------------------------------------
def conv_shuffle_forward(x, params, *, G=8):
    B, C1, H, W = x.shape
    HW = H * W
    C2 = params["conv_w"].shape[0]
    assert params["conv_w"].shape[2:] == (1, 1), "module default is a 1x1 conv"
    assert C2 % (2 * G) == 0 and G % 2 == 0
    cg = C2 // G
    c2g = cg // 2
    half = C2 // 2

    vmem_limit = _vmem_limit_bytes()
    x3 = x.reshape(B, C1, HW).astype(jnp.float32)          # NCHW flatten: free
    w2d = params["conv_w"][:, :, 0, 0].astype(jnp.float32)  # (C2, C1)

    # ---- kernel 1: per-batch input moments (sum_x, Gram) --------------------
    hw_t = _pick_hw_tile(HW, C1)
    partials = pl.pallas_call(
        functools.partial(bn_moments_kernel, c1=C1),
        out_shape=jax.ShapeDtypeStruct((B, C1, C1 + 1), jnp.float32),
        grid=(B, HW // hw_t),
        in_specs=[pl.BlockSpec((1, C1, hw_t), lambda b, t: (b, 0, t))],
        out_specs=pl.BlockSpec((1, C1, C1 + 1), lambda b, t: (b, 0, 0)),
        scratch_shapes=[pltpu.VMEM((C1, 1), jnp.float32),
                        pltpu.VMEM((C1, C1), jnp.float32)],
        compiler_params=pltpu.CompilerParams(
            dimension_semantics=("parallel", "arbitrary"),
            vmem_limit_bytes=vmem_limit),
    )(x3)

    # ---- finalize BN batch stats + fold affine (tiny per-channel math) ------
    n = float(B * HW)
    sum_x = jnp.sum(partials[:, :, 0], axis=0)             # (C1,)
    gram = jnp.sum(partials[:, :, 1:], axis=0)             # (C1, C1)
    mean_y = (w2d @ sum_x) / n                              # (C2,)
    ey2 = jnp.sum((w2d @ gram) * w2d, axis=1) / n           # diag(W G W^T)/N
    var = ey2 - mean_y * mean_y                             # biased variance
    rstd = jax.lax.rsqrt(var + _EPS)
    gamma = params["bn_gamma"].reshape(C2).astype(jnp.float32)
    beta = params["bn_beta"].reshape(C2).astype(jnp.float32)
    scale = rstd * gamma
    shift = beta - mean_y * scale
    rowp = _row_param_table(scale, shift, params, C2, cg, c2g)   # (C2, 7)

    # ---- kernel 2: fused conv + BN apply + LeakyReLU + ShuffleAttention -----
    nblk = _pick_channel_blocks(C2, C1, HW) if HW % 128 == 0 else None
    if nblk is None:
        nblk = 1
    cb = C2 // nblk
    two_halves = (nblk == 1)
    if two_halves:
        out_block = (1, half, 2 * HW)
        out_map = lambda b, j: (b, 0, 0)
    else:
        hb = nblk // 2
        out_block = (1, cb, HW)
        out_map = lambda b, j: (b, j % hb, j // hb)

    out3 = pl.pallas_call(
        functools.partial(fused_apply_kernel, hw=HW, half=half,
                          two_halves=two_halves),
        out_shape=jax.ShapeDtypeStruct((B, half, 2 * HW), jnp.float32),
        grid=(B, nblk),
        in_specs=[
            pl.BlockSpec((1, C1, HW), lambda b, j: (b, 0, 0)),
            pl.BlockSpec((cb, C1), lambda b, j: (j, 0)),
            pl.BlockSpec((cb, 7), lambda b, j: (j, 0)),
        ],
        out_specs=pl.BlockSpec(out_block, out_map),
        compiler_params=pltpu.CompilerParams(
            dimension_semantics=("parallel", "parallel"),
            vmem_limit_bytes=vmem_limit),
    )(x3, w2d, rowp)

    # (B, C2//2, 2*HW) is memory-identical to the channel-shuffled
    # (B, C2, H, W) result -> free reshape, no extra HBM pass.
    return out3.reshape(B, C2, H, W)


# ----------------------------------------------------------------------------
# Pure-JAX reference (same math, no Pallas) for a sanity check.
# ----------------------------------------------------------------------------
def reference_forward(x, params, *, G=8):
    B, C1, H, W = x.shape
    C2 = params["conv_w"].shape[0]
    w2d = params["conv_w"][:, :, 0, 0].T
    xf = jnp.transpose(x, (0, 2, 3, 1)).reshape(B * H * W, C1)
    y = xf @ w2d
    mean = jnp.mean(y, axis=0, keepdims=True)
    var = jnp.mean((y - mean) ** 2, axis=0, keepdims=True)
    y = (y - mean) / jnp.sqrt(var + 1e-5) * params["bn_gamma"] + params["bn_beta"]
    y = jnp.where(y >= 0, y, 0.2 * y)
    y = y.reshape(B, H, W, C2).transpose(0, 3, 1, 2)

    cg = C2 // G
    c2g = cg // 2
    yg = y.reshape(B * G, cg, H * W)
    x0, x1 = yg[:, :c2g, :], yg[:, c2g:, :]
    avg = jnp.mean(x0, axis=2, keepdims=True)
    xc = x0 * jax.nn.sigmoid(params["sa_cweight"][None] * avg
                             + params["sa_cbias"][None])
    mu = jnp.mean(x1, axis=2, keepdims=True)
    var = jnp.mean((x1 - mu) ** 2, axis=2, keepdims=True)
    xn = (x1 - mu) / jnp.sqrt(var + 1e-5)
    xn = xn * params["sa_gn_w"][None] + params["sa_gn_b"][None]
    xs = x1 * jax.nn.sigmoid(params["sa_sweight"][None] * xn
                             + params["sa_sbias"][None])
    out = jnp.concatenate([xc, xs], axis=1).reshape(B, C2, H, W)
    out = out.reshape(B, 2, C2 // 2, H, W).transpose(0, 2, 1, 3, 4)
    return out.reshape(B, C2, H, W)


if __name__ == "__main__":
    B, C1, H, W = 2, 4, 16, 16
    C2, G = 32, 8
    c2g = C2 // (2 * G)

    key = jax.random.PRNGKey(0)
    keys = jax.random.split(key, 10)
    params = {
        # nn.Conv2d(c1, c2, 1, 1, 0, bias=False) -> weight (c2, c1, 1, 1)
        "conv_w": 0.2 * jax.random.normal(keys[0], (C2, C1, 1, 1), jnp.float32),
        # nn.BatchNorm2d(c2) affine params (1, c2)
        "bn_gamma": 1.0 + 0.1 * jax.random.normal(keys[1], (1, C2), jnp.float32),
        "bn_beta": 0.1 * jax.random.normal(keys[2], (1, C2), jnp.float32),
        # ShuffleAttention params, module shape (1, c2//(2G), 1, 1) -> (c2g, 1)
        "sa_cweight": 0.5 * jax.random.normal(keys[3], (c2g, 1), jnp.float32),
        "sa_cbias": 1.0 + 0.1 * jax.random.normal(keys[4], (c2g, 1), jnp.float32),
        "sa_sweight": 0.5 * jax.random.normal(keys[5], (c2g, 1), jnp.float32),
        "sa_sbias": 1.0 + 0.1 * jax.random.normal(keys[6], (c2g, 1), jnp.float32),
        # GroupNorm(c2//(2G), c2//(2G)) affine params, (c2g,) -> (c2g, 1)
        "sa_gn_w": 1.0 + 0.1 * jax.random.normal(keys[7], (c2g, 1), jnp.float32),
        "sa_gn_b": 0.1 * jax.random.normal(keys[8], (c2g, 1), jnp.float32),
    }

    x = jax.random.normal(keys[9], (B, C1, H, W), jnp.float32)

    out = jax.block_until_ready(conv_shuffle_forward(x, params, G=G))
    ref = jax.block_until_ready(reference_forward(x, params, G=G))

    assert out.shape == (B, C2, H, W)
    assert jnp.allclose(out, ref, atol=1e-3, rtol=1e-3), "mismatch vs reference"

    print("KERNEL_OK")
</pallas_src>

<mosaic_0001>
module attributes {stable_mosaic.version = 11 : i64} {
  func.func @bn_moments_kernel(%arg0: i32, %arg1: i32, %arg2: memref<1x4x256xf32, #tpu.memory_space<vmem>>, %arg3: memref<1x4x5xf32, #tpu.memory_space<vmem>>, %arg4: memref<4x1xf32, #tpu.memory_space<vmem>>, %arg5: memref<4x4xf32, #tpu.memory_space<vmem>>) attributes {dimension_semantics = [#tpu.dimension_semantics<parallel>, #tpu.dimension_semantics<arbitrary>], iteration_bounds = array<i64: 2, 1>, scalar_prefetch = 0 : i64, scratch_operands = 2 : i64, tpu.core_type = #tpu.core_type<tc>, window_params = [{transform_indices = @transform_0, window_bounds = array<i64: 1, 4, 256>}, {transform_indices = @transform_1, window_bounds = array<i64: 1, 4, 5>}]} {
    %c0_i32 = arith.constant 0 : i32
    %0 = arith.cmpi eq, %arg1, %c0_i32 : i32
    %1 = arith.extui %0 : i1 to i32
    %c0_i32_0 = arith.constant 0 : i32
    %2 = arith.cmpi ne, %1, %c0_i32_0 : i32
    scf.if %2 {
      %cst_26 = arith.constant 0.000000e+00 : f32
      %45 = vector.broadcast %cst_26 : f32 to vector<4x1xf32>
      %c0_27 = arith.constant 0 : index
      %c0_28 = arith.constant 0 : index
      %46 = vector.load %arg4[%c0_27, %c0_28] : memref<4x1xf32, #tpu.memory_space<vmem>>, vector<4x1xf32>
      tpu.vector_store %arg4[%c0_27, %c0_28], %45 {strides = array<i32>} : memref<4x1xf32, #tpu.memory_space<vmem>>, vector<4x1xf32>,
      %cst_29 = arith.constant 0.000000e+00 : f32
      %47 = vector.broadcast %cst_29 : f32 to vector<4x4xf32>
      %c0_30 = arith.constant 0 : index
      %c0_31 = arith.constant 0 : index
      %48 = vector.load %arg5[%c0_30, %c0_31] : memref<4x4xf32, #tpu.memory_space<vmem>>, vector<4x4xf32>
      tpu.vector_store %arg5[%c0_30, %c0_31], %47 {strides = array<i32>} : memref<4x4xf32, #tpu.memory_space<vmem>>, vector<4x4xf32>,
    } else {
    }
    %c0 = arith.constant 0 : index
    %c0_1 = arith.constant 0 : index
    %c0_2 = arith.constant 0 : index
    %3 = vector.load %arg2[%c0, %c0_1, %c0_2] : memref<1x4x256xf32, #tpu.memory_space<vmem>>, vector<1x4x256xf32>
    %4 = vector.shape_cast %3 : vector<1x4x256xf32> to vector<4x256xf32>
    %c0_3 = arith.constant 0 : index
    %c0_4 = arith.constant 0 : index
    %5 = vector.load %arg4[%c0_3, %c0_4] : memref<4x1xf32, #tpu.memory_space<vmem>>, vector<4x1xf32>
    %cst = arith.constant dense<0.000000e+00> : vector<4xf32>
    %6 = vector.multi_reduction <add>, %4, %cst [1] : vector<4x256xf32> to vector<4xf32>
    %7 = vector.shape_cast %6 : vector<4xf32> to vector<4x1xf32>
    %8 = arith.addf %5, %7 : vector<4x1xf32>
    %c0_5 = arith.constant 0 : index
    %c0_6 = arith.constant 0 : index
    %9 = vector.load %arg4[%c0_5, %c0_6] : memref<4x1xf32, #tpu.memory_space<vmem>>, vector<4x1xf32>
    tpu.vector_store %arg4[%c0_5, %c0_6], %8 {strides = array<i32>} : memref<4x1xf32, #tpu.memory_space<vmem>>, vector<4x1xf32>,
    %c0_7 = arith.constant 0 : index
    %c0_8 = arith.constant 0 : index
    %10 = vector.load %arg5[%c0_7, %c0_8] : memref<4x4xf32, #tpu.memory_space<vmem>>, vector<4x1xf32>
    %11 = vector.extract_strided_slice %4 {offsets = [0, 0], sizes = [1, 256], strides = [1, 1]} : vector<4x256xf32> to vector<1x256xf32>
    %12 = vector.broadcast %11 : vector<1x256xf32> to vector<4x256xf32>
    %13 = arith.mulf %4, %12 : vector<4x256xf32>
    %cst_9 = arith.constant dense<0.000000e+00> : vector<4xf32>
    %14 = vector.multi_reduction <add>, %13, %cst_9 [1] : vector<4x256xf32> to vector<4xf32>
    %15 = vector.shape_cast %14 : vector<4xf32> to vector<4x1xf32>
    %16 = arith.addf %10, %15 : vector<4x1xf32>
    %c0_10 = arith.constant 0 : index
    %c0_11 = arith.constant 0 : index
    %17 = vector.load %arg5[%c0_10, %c0_11] : memref<4x4xf32, #tpu.memory_space<vmem>>, vector<4x1xf32>
    tpu.vector_store %arg5[%c0_10, %c0_11], %16 {strides = array<i32>} : memref<4x4xf32, #tpu.memory_space<vmem>>, vector<4x1xf32>,
    %c0_12 = arith.constant 0 : index
    %c1 = arith.constant 1 : index
    %18 = vector.load %arg5[%c0_12, %c1] : memref<4x4xf32, #tpu.memory_space<vmem>>, vector<4x1xf32>
    %19 = vector.extract_strided_slice %4 {offsets = [1, 0], sizes = [1, 256], strides = [1, 1]} : vector<4x256xf32> to vector<1x256xf32>
    %20 = vector.broadcast %19 : vector<1x256xf32> to vector<4x256xf32>
    %21 = arith.mulf %4, %20 : vector<4x256xf32>
    %cst_13 = arith.constant dense<0.000000e+00> : vector<4xf32>
    %22 = vector.multi_reduction <add>, %21, %cst_13 [1] : vector<4x256xf32> to vector<4xf32>
    %23 = vector.shape_cast %22 : vector<4xf32> to vector<4x1xf32>
    %24 = arith.addf %18, %23 : vector<4x1xf32>
    %c0_14 = arith.constant 0 : index
    %c1_15 = arith.constant 1 : index
    %25 = vector.load %arg5[%c0_14, %c1_15] : memref<4x4xf32, #tpu.memory_space<vmem>>, vector<4x1xf32>
    tpu.vector_store %arg5[%c0_14, %c1_15], %24 {strides = array<i32>} : memref<4x4xf32, #tpu.memory_space<vmem>>, vector<4x1xf32>,
    %c0_16 = arith.constant 0 : index
    %c2 = arith.constant 2 : index
    %26 = vector.load %arg5[%c0_16, %c2] : memref<4x4xf32, #tpu.memory_space<vmem>>, vector<4x1xf32>
    %27 = vector.extract_strided_slice %4 {offsets = [2, 0], sizes = [1, 256], strides = [1, 1]} : vector<4x256xf32> to vector<1x256xf32>
    %28 = vector.broadcast %27 : vector<1x256xf32> to vector<4x256xf32>
    %29 = arith.mulf %4, %28 : vector<4x256xf32>
    %cst_17 = arith.constant dense<0.000000e+00> : vector<4xf32>
    %30 = vector.multi_reduction <add>, %29, %cst_17 [1] : vector<4x256xf32> to vector<4xf32>
    %31 = vector.shape_cast %30 : vector<4xf32> to vector<4x1xf32>
    %32 = arith.addf %26, %31 : vector<4x1xf32>
    %c0_18 = arith.constant 0 : index
    %c2_19 = arith.constant 2 : index
    %33 = vector.load %arg5[%c0_18, %c2_19] : memref<4x4xf32, #tpu.memory_space<vmem>>, vector<4x1xf32>
    tpu.vector_store %arg5[%c0_18, %c2_19], %32 {strides = array<i32>} : memref<4x4xf32, #tpu.memory_space<vmem>>, vector<4x1xf32>,
    %c0_20 = arith.constant 0 : index
    %c3 = arith.constant 3 : index
    %34 = vector.load %arg5[%c0_20, %c3] : memref<4x4xf32, #tpu.memory_space<vmem>>, vector<4x1xf32>
    %35 = vector.extract_strided_slice %4 {offsets = [3, 0], sizes = [1, 256], strides = [1, 1]} : vector<4x256xf32> to vector<1x256xf32>
    %36 = vector.broadcast %35 : vector<1x256xf32> to vector<4x256xf32>
    %37 = arith.mulf %4, %36 : vector<4x256xf32>
    %cst_21 = arith.constant dense<0.000000e+00> : vector<4xf32>
    %38 = vector.multi_reduction <add>, %37, %cst_21 [1] : vector<4x256xf32> to vector<4xf32>
    %39 = vector.shape_cast %38 : vector<4xf32> to vector<4x1xf32>
    %40 = arith.addf %34, %39 : vector<4x1xf32>
    %c0_22 = arith.constant 0 : index
    %c3_23 = arith.constant 3 : index
    %41 = vector.load %arg5[%c0_22, %c3_23] : memref<4x4xf32, #tpu.memory_space<vmem>>, vector<4x1xf32>
    tpu.vector_store %arg5[%c0_22, %c3_23], %40 {strides = array<i32>} : memref<4x4xf32, #tpu.memory_space<vmem>>, vector<4x1xf32>,
    %c0_i32_24 = arith.constant 0 : i32
    %42 = arith.cmpi eq, %arg1, %c0_i32_24 : i32
    %43 = arith.extui %42 : i1 to i32
    %c0_i32_25 = arith.constant 0 : i32
    %44 = arith.cmpi ne, %43, %c0_i32_25 : i32
    scf.if %44 {
      %c0_26 = arith.constant 0 : index
      %c0_27 = arith.constant 0 : index
      %45 = vector.load %arg4[%c0_26, %c0_27] : memref<4x1xf32, #tpu.memory_space<vmem>>, vector<4x1xf32>
      %c0_28 = arith.constant 0 : index
      %c0_29 = arith.constant 0 : index
      %c0_30 = arith.constant 0 : index
      %46 = vector.load %arg3[%c0_28, %c0_29, %c0_30] : memref<1x4x5xf32, #tpu.memory_space<vmem>>, vector<1x4x1xf32>
      %47 = vector.shape_cast %46 : vector<1x4x1xf32> to vector<4x1xf32>
      %48 = vector.shape_cast %45 : vector<4x1xf32> to vector<1x4x1xf32>
      tpu.vector_store %arg3[%c0_28, %c0_29, %c0_30], %48 {strides = array<i32>} : memref<1x4x5xf32, #tpu.memory_space<vmem>>, vector<1x4x1xf32>,
      %c0_31 = arith.constant 0 : index
      %c0_32 = arith.constant 0 : index
      %49 = vector.load %arg5[%c0_31, %c0_32] : memref<4x4xf32, #tpu.memory_space<vmem>>, vector<4x4xf32>
      %c0_33 = arith.constant 0 : index
      %c0_34 = arith.constant 0 : index
      %c1_35 = arith.constant 1 : index
      %50 = vector.load %arg3[%c0_33, %c0_34, %c1_35] : memref<1x4x5xf32, #tpu.memory_space<vmem>>, vector<1x4x4xf32>
      %51 = vector.shape_cast %50 : vector<1x4x4xf32> to vector<4x4xf32>
      %52 = vector.shape_cast %49 : vector<4x4xf32> to vector<1x4x4xf32>
      tpu.vector_store %arg3[%c0_33, %c0_34, %c1_35], %52 {strides = array<i32>} : memref<1x4x5xf32, #tpu.memory_space<vmem>>, vector<1x4x4xf32>,
    } else {
    }
    return
  }
  func.func @transform_0(%arg0: i32, %arg1: i32) -> (i32, i32, i32) {
    %c0_i32 = arith.constant 0 : i32
    %c0_i32_0 = arith.constant 0 : i32
    return %arg0, %c0_i32, %arg1 : i32, i32, i32
  }
  func.func @transform_1(%arg0: i32, %arg1: i32) -> (i32, i32, i32) {
    %c0_i32 = arith.constant 0 : i32
    %c0_i32_0 = arith.constant 0 : i32
    %c0_i32_1 = arith.constant 0 : i32
    return %arg0, %c0_i32, %c0_i32_0 : i32, i32, i32
  }
}

</mosaic_0001>

<llo_original>
// kernel: tpu_custom_call.1
$region0: #{tpu_custom_call.1}
  #allocation0 [shape = 'u32[]', space=smem, size = 0x4, offset = 0x4, fixed_abs, tag = 'smem constant byte address 0x4 - core index']
  #allocation1 [shape = 'u32[144,128]{1,0:T(1,128)}', space=vmem, size = 0x12000, scoped, tag = 'internal scratch']
  #allocation2 [shape = 'f32[4,1]{1,0:T(4,128)}', space=vmem, size = 0x800, scoped, tag = 'scratch operand']
  #allocation3 [shape = 'f32[4,4]{1,0:T(4,128)}', space=vmem, size = 0x800, scoped, tag = 'scratch operand']
  %s0 = inlined_call_operand.hbm [shape: f32[2,4,256], index: 0, kind: input, shape index: {}]
  %s1 = inlined_call_operand.hbm [shape: f32[2,4,5], index: 1, kind: output, shape index: {}]
  %s2 = sld [smem:[#allocation0]]
  $region49: #{tpu_custom_call.1} parent=0
    _
  %s4 = ssub.s32 1, %s2
  %s5 = scalar_select 0, %s4, %s2
  $region1: #{tpu_custom_call.1} parent=0
    #allocation4 [shape = 'u8[8192]{0}', space=vmem, size = 0x2000, scoped, tag = 'input window, operand 0']
    #allocation5 [shape = 's32[2]{0}', space=sflag, size = 0x8, scoped, tag = 'scoped memory for tpu_custom_call.1']
    #allocation6 [shape = 's32[2]{0}', space=sflag, size = 0x8, scoped, tag = 'scoped memory for tpu_custom_call.1']
    #allocation7 [shape = 'u8[4096]{0}', space=vmem, size = 0x1000, scoped, tag = 'output window, operand 0']
    %6 = vsyncpa [#allocation5], 0
    %s7 = scalar_lea.sflag [#allocation5], 1
    %8 = vsyncpa %s7, 0
    %9 = vsyncpa [#allocation6], 0
    %s10 = scalar_lea.sflag [#allocation6], 1
    %11 = vsyncpa %s10, 0
    loop: start=0, step=1, limit=4
    $region2: #{tpu_custom_call.1} parent=1 // loop_pre_header
      _
    $region3: #{tpu_custom_call.1} parent=1 // loop_header
      %s13 = sphi 0, %s17
      %p14 = scmp.ge.s32.totalorder %s13, 4
      %s20 = sphi 0, %s32
      %s21 = sphi 0, %s28
      %s22 = sphi 0, %s20
      %s23 = sphi 0, %s21
      %s24 = sphi 0, %s22
      %s25 = sphi 0, %s23
      %s37 = sphi 0, %s39
      %s40 = sphi 0, %s37
      %s41 = sphi 0, %s40
      %s57 = sphi 0, %s41
      %s63 = sphi 0, %s65
      %s66 = sphi 0, %s63
      %s67 = sphi 0, %s66
      %s83 = sphi 0, %s67
    $region4: #{tpu_custom_call.1} parent=1 // loop_header_branch
      %16 = sbr.rel (%p14) target = $region8
    $region5: #{tpu_custom_call.1} parent=1 // loop_body
      %s18 = ssub.s32 %s13, 1
      %s19 = ssub.s32 %s13, 2
      %s26 = sadd.s32 1, %s21
      %p27 = scmp.ge.s32.totalorder %s26, 1
      %s28 = scalar_select %p27, 0, %s26
      %s29 = sadd.s32 1, %s20
      %s30 = scalar_select %p27, %s29, %s20
      %p31 = scmp.ge.s32.totalorder %s30, 2
      %s32 = scalar_select %p31, 0, %s30
      %s33 = ssub.s32 %s20, %s32
      %s34 = ssub.s32 %s21, %s28
      %s35 = sor.u32 %s33, %s34
      %p36 = scmp.eq.s32.totalorder %s35, 0
      %s38 = sadd.s32 %s37, 1
      %s39 = scalar_select %p36, %s37, %s38
      %p42 = pneg %p36
      %p43 = scmp.eq.s32.totalorder %s13, 1
      %p44 = por %p42, %p43
      %p45 = scmp.ne.s32.totalorder %s37, %s40
      %p46 = scmp.eq.s32.totalorder %s13, 0
      %p47 = por %p45, %p46
      %p48 = scmp.ne.s32.totalorder %s37, %s40
      %p49 = scmp.eq.s32.totalorder %s18, 1
      %p50 = por %p48, %p49
      %p51 = scmp.ne.s32.totalorder %s40, %s41
      %p52 = scmp.eq.s32.totalorder %s18, 0
      %p53 = por %p51, %p52
      %p54 = scmp.ne.s32.totalorder %s40, %s41
      %p55 = scmp.eq.s32.totalorder %s19, 1
      %p56 = por %p54, %p55
      %p58 = scmp.ne.s32.totalorder %s41, %s57
      %p59 = scmp.eq.s32.totalorder %s19, 0
      %p60 = por %p58, %p59
      %s61 = ssub.s32 %s20, %s32
      %p62 = scmp.eq.s32.totalorder %s61, 0
      %s64 = sadd.s32 %s63, 1
      %s65 = scalar_select %p62, %s63, %s64
      %p68 = pneg %p62
      %p69 = scmp.eq.s32.totalorder %s13, 1
      %p70 = por %p68, %p69
      %p71 = scmp.ne.s32.totalorder %s63, %s66
      %p72 = scmp.eq.s32.totalorder %s13, 0
      %p73 = por %p71, %p72
      %p74 = scmp.ne.s32.totalorder %s63, %s66
      %p75 = scmp.eq.s32.totalorder %s18, 1
      %p76 = por %p74, %p75
      %p77 = scmp.ne.s32.totalorder %s66, %s67
      %p78 = scmp.eq.s32.totalorder %s18, 0
      %p79 = por %p77, %p78
      %p80 = scmp.ne.s32.totalorder %s66, %s67
      %p81 = scmp.eq.s32.totalorder %s19, 1
      %p82 = por %p80, %p81
      %p84 = scmp.ne.s32.totalorder %s67, %s83
      %p85 = scmp.eq.s32.totalorder %s19, 0
      %p86 = por %p84, %p85
      %p87 = scmp.le.s32.totalorder 1, %s13
      %p88 = scmp.lt.s32.totalorder %s13, 3
      %p89 = pnand %p87, %p88
      %p90 = pneg %p89
      // Predicated region
      $region9: #{tpu_custom_call.1} parent=5 // pred_check
        _
      $region10: #{tpu_custom_call.1} parent=5 // pred_check_branch
        %92 = sbr.rel (%p89) target = $region12
      $region11: #{tpu_custom_call.1} parent=5 // pred_region
        %s93 = ssub.s32 %s13, 1
      $region12: #{tpu_custom_call.1} parent=5 // pred_fallthru
        _
      %p94 = scmp.lt.s32.totalorder %s13, 2
      // Predicated region
      $region13: #{tpu_custom_call.1} parent=5 // pred_check
        %p95 = pneg %p94
      $region14: #{tpu_custom_call.1} parent=5 // pred_check_branch
        %97 = sbr.rel (%p95) target = $region16
      $region15: #{tpu_custom_call.1} parent=5 // pred_region
        // Predicated region
        $region17: #{tpu_custom_call.1} parent=15 // pred_check
          %p98 = pneg %p47
        $region18: #{tpu_custom_call.1} parent=15 // pred_check_branch
          %100 = sbr.rel (%p98) target = $region20
        $region19: #{tpu_custom_call.1} parent=15 // pred_region
          %s101 = sand.u32 %s37, 1
          %s102 = scalar_lea.sflag [#allocation5], %s101
          %s103 = sand.u32 %s37, 1
          %s104 = smul.addr %s103, 8
          %s105 = scalar_lea.vmem [#allocation4], %s104
          %s106 = smul.u32 2, %s21
          %s108 = ssub.s32 128, 128
          %109 = vsyncadd %s102, %s108
          %s110 = smul.addr %s20, 2
          %s111 = sadd.s32 %s106, %s110
          %s112 = smul.addr %s111, 64
          %s113 = scalar_lea.hbm %s0, %s112
          %s115 = sshll.u32 %s105, 4
          %s116 = int_to_ptr.vmem [resolvable:$true] %s115
          %118 = dma.hbm_to_vmem [thread:$0]  %s113, 128, %s116, %s102
        $region20: #{tpu_custom_call.1} parent=15 // pred_fallthru
          _
      $region16: #{tpu_custom_call.1} parent=5 // pred_fallthru
        _
      %p119 = scmp.le.s32.totalorder 1, %s13
      %p120 = scmp.lt.s32.totalorder %s13, 3
      %p121 = pnand %p119, %p120
      %p122 = pneg %p121
      // Predicated region
      $region21: #{tpu_custom_call.1} parent=5 // pred_check
        _
      $region22: #{tpu_custom_call.1} parent=5 // pred_check_branch
        %124 = sbr.rel (%p121) target = $region24
      $region23: #{tpu_custom_call.1} parent=5 // pred_region
        %s125 = ssub.s32 %s13, 1
        %s126 = sand.u32 %s40, 1
        %s127 = scalar_lea.sflag [#allocation5], %s126
        %s128 = sand.u32 %s40, 1
        %s129 = smul.addr %s128, 8
        %s130 = scalar_lea.vmem [#allocation4], %s129
        // Predicated region
        $region25: #{tpu_custom_call.1} parent=23 // pred_check
          %p131 = pneg %p53
        $region26: #{tpu_custom_call.1} parent=23 // pred_check_branch
          %133 = sbr.rel (%p131) target = $region28
        $region27: #{tpu_custom_call.1} parent=23 // pred_region
          %134 = dma.done %s127, 128
        $region28: #{tpu_custom_call.1} parent=23 // pred_fallthru
          _
        %s135 = sand.u32 %s40, 1
        %s136 = scalar_lea.sflag [#allocation5], %s135
        %s137 = sand.u32 %s40, 1
        %s138 = smul.addr %s137, 8
        %s139 = scalar_lea.vmem [#allocation4], %s138
        %p140 = pneg %p53
        %p141 = pneg %p50
        %p142 = pneg %p79
        %p143 = pneg %p76
        %s144 = sand.u32 %s66, 1
        %s145 = scalar_lea.sflag [#allocation6], %s144
        %s146 = sand.u32 %s66, 1
        %s147 = smul.addr %s146, 4
        %s148 = scalar_lea.vmem [#allocation7], %s147
        %s149 = smul.u32 2, %s23
        %p150 = scmp.eq.s32.totalorder %s23, 0
        // Predicated region
        $region29: #{tpu_custom_call.1} parent=23 // pred_check
          %p151 = pneg %p150
        $region30: #{tpu_custom_call.1} parent=23 // pred_check_branch
          %153 = sbr.rel (%p151) target = $region32
        $region31: #{tpu_custom_call.1} parent=23 // pred_region
          %vm154 = vcmask 3072
          %155 = vst.msk [vmem:[#allocation2] sm:$0xf] %vm154, 0.0
          %vm156 = vcmask 27648
          %157 = vst.msk [vmem:[#allocation3] sm:$0xf] %vm156, 0.0
        $region32: #{tpu_custom_call.1} parent=23 // pred_fallthru
          _
        %v158 = vld [vmem:[%s130] sm:$0xff]
        %v159 = vld [vmem:[#allocation2] sm:$0xf]
        %v161 = vcombine.high %v158, %v158
        %vm163 = vcmask 1043456
        %v164 = vsel %vm163, %v158, 0.0
        %v165 = vsel %vm163, %v161, 0.0
        %v166 = vadd.f32 %v164, %v165
        %167 = vadd.xlane.f32.xlu0 %v166
        %v168 = vpop.xlane.xlu0 %167
        %v169 = vadd.f32 %v159, %v168
        %vm170 = vcmask 3072
        %171 = vst.msk [vmem:[#allocation2] sm:$0xf] %vm170, %v169
        %v172 = vld [vmem:[#allocation3] sm:$0xf]
        %v173 = vlaneseq
        %v174 = vshrl.u32 %v173, 7
        %v175 = vsub.s32 0, %v174
        %v176 = vrot.slane %v158, %v175
        %v177 = vlaneseq
        %v178 = vshrl.u32 %v177, 7
        %v179 = vsub.s32 4, %v178
        %v180 = vrot.slane %v158, %v179
        %v183 = vlaneseq
        %v184 = vshrl.u32 %v183, 7
        %v185 = vsub.s32 0, %v184
        %v186 = vrot.slane %v176, %v185
        %v187 = vlaneseq
        %v188 = vshrl.u32 %v187, 7
        %v189 = vsub.s32 0, %v188
        %v190 = vrot.slane %v180, %v189
        %v193 = vcombine.low %v186, %v190
        %v195 = vmul.f32 %v158, %v193
        %v197 = vcombine.high %v195, %v195
        %v199 = vsel %vm163, %v195, 0.0
        %v200 = vsel %vm163, %v197, 0.0
        %v201 = vadd.f32 %v199, %v200
        %202 = vadd.xlane.f32.xlu0 %v201
        %v203 = vpop.xlane.xlu0 %202
        %v204 = vadd.f32 %v172, %v203
        %205 = vst.msk [vmem:[#allocation3] sm:$0xf] %vm170, %v204
        %v206 = vld [vmem:[#allocation3] sm:$0xf]
        %v207 = vlaneseq
        %v208 = vshrl.u32 %v207, 7
        %v209 = vsub.s32 1, %v208
        %v210 = vrot.slane %v158, %v209
        %v211 = vlaneseq
        %v212 = vshrl.u32 %v211, 7
        %v213 = vsub.s32 5, %v212
        %v214 = vrot.slane %v158, %v213
        %v217 = vlaneseq
        %v218 = vshrl.u32 %v217, 7
        %v219 = vsub.s32 1, %v218
        %v220 = vrot.slane %v210, %v219
        %v221 = vlaneseq
        %v222 = vshrl.u32 %v221, 7
        %v223 = vsub.s32 1, %v222
        %v224 = vrot.slane %v214, %v223
        %v227 = vcombine.low %v220, %v224
        %v229 = vmul.f32 %v158, %v227
        %v231 = vcombine.high %v229, %v229
        %v233 = vsel %vm163, %v229, 0.0
        %v234 = vsel %vm163, %v231, 0.0
        %v235 = vadd.f32 %v233, %v234
        %236 = vadd.xlane.f32.xlu0 %v235
        %v237 = vpop.xlane.xlu0 %236
        %v238 = vadd.f32 %v206, %v237
        %vm239 = vcmask 11272
        %240 = vst.msk [vmem:[#allocation3] sm:$0xf] %vm239, %v238
        %v241 = vld [vmem:[#allocation3] sm:$0xf]
        %v242 = vlaneseq
        %v243 = vshrl.u32 %v242, 7
        %v244 = vsub.s32 2, %v243
        %v245 = vrot.slane %v158, %v244
        %v246 = vlaneseq
        %v247 = vshrl.u32 %v246, 7
        %v248 = vsub.s32 6, %v247
        %v249 = vrot.slane %v158, %v248
        %v252 = vlaneseq
        %v253 = vshrl.u32 %v252, 7
        %v254 = vsub.s32 2, %v253
        %v255 = vrot.slane %v245, %v254
        %v256 = vlaneseq
        %v257 = vshrl.u32 %v256, 7
        %v258 = vsub.s32 2, %v257
        %v259 = vrot.slane %v249, %v258
        %v262 = vcombine.low %v255, %v259
        %v264 = vmul.f32 %v158, %v262
        %v266 = vcombine.high %v264, %v264
        %v268 = vsel %vm163, %v264, 0.0
        %v269 = vsel %vm163, %v266, 0.0
        %v270 = vadd.f32 %v268, %v269
        %271 = vadd.xlane.f32.xlu0 %v270
        %v272 = vpop.xlane.xlu0 %271
        %v273 = vadd.f32 %v241, %v272
        %vm274 = vcmask 19472
        %275 = vst.msk [vmem:[#allocation3] sm:$0xf] %vm274, %v273
        %v276 = vld [vmem:[#allocation3] sm:$0xf]
        %v277 = vlaneseq
        %v278 = vshrl.u32 %v277, 7
        %v279 = vsub.s32 3, %v278
        %v280 = vrot.slane %v158, %v279
        %v281 = vlaneseq
        %v282 = vshrl.u32 %v281, 7
        %v283 = vsub.s32 7, %v282
        %v284 = vrot.slane %v158, %v283
        %v287 = vlaneseq
        %v288 = vshrl.u32 %v287, 7
        %v289 = vsub.s32 3, %v288
        %v290 = vrot.slane %v280, %v289
        %v291 = vlaneseq
        %v292 = vshrl.u32 %v291, 7
        %v293 = vsub.s32 3, %v292
        %v294 = vrot.slane %v284, %v293
        %v297 = vcombine.low %v290, %v294
        %v299 = vmul.f32 %v158, %v297
        %v301 = vcombine.high %v299, %v299
        %v303 = vsel %vm163, %v299, 0.0
        %v304 = vsel %vm163, %v301, 0.0
        %v305 = vadd.f32 %v303, %v304
        %306 = vadd.xlane.f32.xlu0 %v305
        %v307 = vpop.xlane.xlu0 %306
        %v308 = vadd.f32 %v276, %v307
        %vm309 = vcmask 27672
        %310 = vst.msk [vmem:[#allocation3] sm:$0xf] %vm309, %v308
        // Predicated region
        $region33: #{tpu_custom_call.1} parent=23 // pred_check
          %p311 = pneg %p150
        $region34: #{tpu_custom_call.1} parent=23 // pred_check_branch
          %313 = sbr.rel (%p311) target = $region36
        $region35: #{tpu_custom_call.1} parent=23 // pred_region
          %v314 = vld [vmem:[#allocation2] sm:$0xf]
          %315 = vst.msk [vmem:[%s148] sm:$0xf] %vm170, %v314
          %v316 = vld [vmem:[#allocation3] sm:$0xf]
          %318 = vrot.lane.b32.xlu0 %v316, 1
          %v319 = vpop.permute.xlu0 %318
          %vm321 = vcmask 35848
          %322 = vst.msk [vmem:[%s148] sm:$0xf] %vm321, %v319
        $region36: #{tpu_custom_call.1} parent=23 // pred_fallthru
          _
        %s323 = sand.u32 %s66, 1
        %s324 = scalar_lea.sflag [#allocation6], %s323
        %s325 = sand.u32 %s66, 1
        %s326 = smul.addr %s325, 4
        %s327 = scalar_lea.vmem [#allocation7], %s326
        // Predicated region
        $region37: #{tpu_custom_call.1} parent=23 // pred_check
          %p328 = pneg %p76
        $region38: #{tpu_custom_call.1} parent=23 // pred_check_branch
          %330 = sbr.rel (%p328) target = $region40
        $region39: #{tpu_custom_call.1} parent=23 // pred_region
          %s332 = ssub.s32 64, 64
          %333 = vsyncadd %s324, %s332
          %s334 = smul.addr %s22, 64
          %s335 = scalar_lea.hbm %s1, %s334
          %s337 = sshll.u32 %s327, 4
          %s338 = int_to_ptr.vmem [resolvable:$true] %s337
          %340 = dma.vmem_to_hbm [thread:$0]  %s338, 64, %s335, %s324
        $region40: #{tpu_custom_call.1} parent=23 // pred_fallthru
          _
      $region24: #{tpu_custom_call.1} parent=5 // pred_fallthru
        _
      %p341 = scmp.le.s32.totalorder 2, %s13
      // Predicated region
      $region41: #{tpu_custom_call.1} parent=5 // pred_check
        %p342 = pneg %p341
      $region42: #{tpu_custom_call.1} parent=5 // pred_check_branch
        %344 = sbr.rel (%p342) target = $region44
      $region43: #{tpu_custom_call.1} parent=5 // pred_region
        %s345 = ssub.s32 %s13, 2
        // Predicated region
        $region45: #{tpu_custom_call.1} parent=43 // pred_check
          %p346 = pneg %p82
        $region46: #{tpu_custom_call.1} parent=43 // pred_check_branch
          %348 = sbr.rel (%p346) target = $region48
        $region47: #{tpu_custom_call.1} parent=43 // pred_region
          %s349 = sand.u32 %s67, 1
          %s350 = scalar_lea.sflag [#allocation6], %s349
          %s351 = sand.u32 %s67, 1
          %s352 = smul.addr %s351, 4
          %s353 = scalar_lea.vmem [#allocation7], %s352
          %354 = dma.done %s350, 64
        $region48: #{tpu_custom_call.1} parent=43 // pred_fallthru
          _
      $region44: #{tpu_custom_call.1} parent=5 // pred_fallthru
        _
    $region6: #{tpu_custom_call.1} parent=1 // loop_footer
      %s17 = sadd.s32 1, %s13
    $region7: #{tpu_custom_call.1} parent=1 // loop_footer_branch
      %12 = sbr.rel target = $region3
    $region8: #{tpu_custom_call.1} parent=1 // loop_exit
      _
    %355 = vsyncpa [#allocation5], 1
    %s356 = scalar_lea.sflag [#allocation5], 1
    %357 = vsyncpa %s356, 1
    %358 = vsyncpa [#allocation6], 1
    %s359 = scalar_lea.sflag [#allocation6], 1
    %360 = vsyncpa %s359, 1

</llo_original>
